<compile_context>
chip_gen: v6e
topology: v6e:2x2x1
jax: 0.10.0
libtpu: 0.0.40
codegen_flags: <defaults>
</compile_context>

<pallas_src>
import functools

import jax
import jax.numpy as jnp
from jax.experimental import pallas as pl
from jax.experimental.pallas import tpu as pltpu

_LANE = 128


def _round_up(a, b):
    return ((a + b - 1) // b) * b


def _spline_kernel(mids_ref, values_ref, x_ref, o_ref, *, num_breakpoints):
    """Nearest-knot lookup on one (tile_rows, 128) block via midpoint thresholds.

    mids_ref:   SMEM (K-1,) float32 — midpoints between consecutive sorted knots
    values_ref: SMEM (K,)   float32 — spline values at the sorted knots
    x_ref, o_ref: VMEM (tile_rows, 128) float32
    """
    x = x_ref[...]
    # Start at the lowest knot's value; NaN inputs fall through to values[0],
    # matching the argmin reference (all comparisons below are False for NaN).
    out = jnp.full_like(x, values_ref[0])
    for k in range(1, num_breakpoints):
        # Strict `>` keeps the lower-index knot on exact-midpoint ties, matching
        # torch.min's first-index tie-breaking for sorted ascending knots.
        out = jnp.where(x > mids_ref[k - 1], values_ref[k], out)
    o_ref[...] = out


def _spline_eval_jnp(x, mids, values_s):
    """Same midpoint-threshold chain in plain jnp (used for the <128-elem tail,
    and usable stand-alone when the call site wants XLA fusion instead of a
    dedicated HBM round trip)."""
    out = jnp.full_like(x, values_s[0])
    for k in range(1, values_s.shape[0]):
        out = jnp.where(x > mids[k - 1], values_s[k], out)
    return out


def linear_spline_forward(x, knots, values, *, tile_rows=4096):
    """Evaluate the LinearSpline at points x.

    Args:
      x:      jnp array of any shape.
      knots:  (K,) float32 knot positions.
      values: (K,) float32 values at each knot.
      tile_rows: rows (of 128 lanes) per grid block.  4096 -> 2 MiB/block,
        ~8 MiB double-buffered in+out, safe on all of v5e/v6e/v7x.  On v6e one
        may push to 8192 together with vmem_limit_bytes~=40<<20; do not copy
        that setting to v5e (16 MiB scoped default) or v7x (64 MiB physical).

    Returns:
      (x.size,) float32 — flat result, same convention as the PyTorch module.
    """
    knots = knots.astype(jnp.float32)
    values = values.astype(jnp.float32)
    num_breakpoints = knots.shape[0]

    x_flat = x.reshape(-1).astype(jnp.float32)
    n = x_flat.shape[0]

    if num_breakpoints == 1:
        return jnp.full((n,), values[0], jnp.float32)

    # Sort knots ascending (the module initializes them sorted via linspace;
    # sorting keeps the midpoint formulation valid if the learnable knots drift).
    # NOTE: for duplicate knots the original-order argmin tie-break is not
    # reproducible by any threshold chain; linspace-initialized knots are distinct.
    order = jnp.argsort(knots)
    knots_s = knots[order]
    values_s = values[order]
    mids = 0.5 * (knots_s[:-1] + knots_s[1:])  # (K-1,)

    rows = n // _LANE          # lane-aligned prefix handled by the kernel
    rem = n % _LANE            # <128-element tail handled by a jnp epilogue

    main_out = None
    if rows > 0:
        aligned = rows * _LANE
        # When rem == 0 (the hot path) this slice is the identity and the
        # reshape is a row-major bitcast: zero extra HBM traffic.
        x2d = x_flat[:aligned].reshape(rows, _LANE)

        # Clamp tile to the array (keep the sublane dim a multiple of 8 so the
        # (8,128) BlockSpec constraint holds; a trailing partial block is masked
        # by Pallas — no padding needed).
        tile = max(8, min(tile_rows, _round_up(rows, 8)))
        grid = (pl.cdiv(rows, tile),)

        kernel = functools.partial(_spline_kernel,
                                   num_breakpoints=num_breakpoints)

        out2d = pl.pallas_call(
            kernel,
            out_shape=jax.ShapeDtypeStruct((rows, _LANE), jnp.float32),
            grid_spec=pltpu.PrefetchScalarGridSpec(
                num_scalar_prefetch=0,
                grid=grid,
                in_specs=[
                    pl.BlockSpec(memory_space=pltpu.MemorySpace.SMEM),  # mids
                    pl.BlockSpec(memory_space=pltpu.MemorySpace.SMEM),  # values
                    pl.BlockSpec((tile, _LANE), lambda i: (i, 0)),      # x tiles
                ],
                out_specs=pl.BlockSpec((tile, _LANE), lambda i: (i, 0)),
            ),
            compiler_params=pltpu.CompilerParams(
                dimension_semantics=("parallel",)
            ),
        )(mids, values_s, x2d)
        main_out = out2d.reshape(-1)

    if rem == 0:
        return main_out

    tail_out = _spline_eval_jnp(x_flat[rows * _LANE:], mids, values_s)
    if main_out is None:
        return tail_out
    return jnp.concatenate([main_out, tail_out])


def linear_spline_reference(x, knots, values):
    """Pure-JAX reference matching the PyTorch forward exactly."""
    x_flat = x.reshape(1, -1).astype(jnp.float32)
    distances = jnp.abs(x_flat - knots.reshape(-1, 1))  # (K, N)
    indices = jnp.argmin(distances, axis=0)             # first-min on ties
    return values[indices]


if __name__ == "__main__":
    # Parameter setup (matches LinearSpline.__init__):
    num_breakpoints = 10
    init_range = (-3.0, 3.0)
    knots = jnp.linspace(init_range[0], init_range[1], num_breakpoints,
                         dtype=jnp.float32)
    # zero_init=False path (deterministic): values = randn(K) * 0.01
    # (zero_init=True would simply make the output all zeros.)
    key = jax.random.PRNGKey(0)
    key_vals, key_x, key_x2, key_x3 = jax.random.split(key, 4)
    values = jax.random.normal(key_vals, (num_breakpoints,), jnp.float32) * 0.01

    # 1) Aligned case: NCHW tensor, n = 2048 (n % 128 == 0 -> zero-copy path).
    x = jax.random.normal(key_x, (2, 4, 16, 16), jnp.float32) * 2.0
    out = jax.block_until_ready(linear_spline_forward(x, knots, values))
    ref = linear_spline_reference(x, knots, values)
    assert out.shape == (x.size,), (out.shape, x.size)
    assert jnp.allclose(out, ref), "mismatch vs reference (aligned case)"

    # 2) Tiny ragged case (n = 105 < 128): exercises the pure-jnp tail path.
    x_rag = jax.random.normal(key_x2, (3, 5, 7), jnp.float32) * 2.0
    out_rag = jax.block_until_ready(linear_spline_forward(x_rag, knots, values))
    ref_rag = linear_spline_reference(x_rag, knots, values)
    assert out_rag.shape == (x_rag.size,), (out_rag.shape, x_rag.size)
    assert jnp.allclose(out_rag, ref_rag), "mismatch vs reference (tiny ragged)"

    # 3) Ragged case (n = 715): kernel on 5 aligned rows (partial grid block,
    #    masked by Pallas) + 75-element jnp tail.  No pad / slice round trips.
    x_rag2 = jax.random.normal(key_x3, (5, 11, 13), jnp.float32) * 2.0
    out_rag2 = jax.block_until_ready(linear_spline_forward(x_rag2, knots, values))
    ref_rag2 = linear_spline_reference(x_rag2, knots, values)
    assert out_rag2.shape == (x_rag2.size,), (out_rag2.shape, x_rag2.size)
    assert jnp.allclose(out_rag2, ref_rag2), "mismatch vs reference (ragged)"

    print("KERNEL_OK")
</pallas_src>

<mosaic_0001>
module attributes {stable_mosaic.version = 11 : i64} {
  func.func @_spline_kernel(%arg0: i32, %arg1: memref<9xf32, #tpu.memory_space<smem>>, %arg2: memref<10xf32, #tpu.memory_space<smem>>, %arg3: memref<16x128xf32, #tpu.memory_space<vmem>>, %arg4: memref<16x128xf32, #tpu.memory_space<vmem>>) attributes {dimension_semantics = [#tpu.dimension_semantics<parallel>], iteration_bounds = array<i64: 1>, scalar_prefetch = 0 : i64, scratch_operands = 0 : i64, tpu.core_type = #tpu.core_type<tc>, window_params = [{transform_indices = @transform_0, window_bounds = array<i64: 9>}, {transform_indices = @transform_1, window_bounds = array<i64: 10>}, {transform_indices = @transform_2, window_bounds = array<i64: 16, 128>}, {transform_indices = @transform_3, window_bounds = array<i64: 16, 128>}]} {
    %c0 = arith.constant 0 : index
    %c0_0 = arith.constant 0 : index
    %0 = vector.load %arg3[%c0, %c0_0] : memref<16x128xf32, #tpu.memory_space<vmem>>, vector<16x128xf32>
    %c0_1 = arith.constant 0 : index
    %1 = memref.load %arg2[%c0_1] : memref<10xf32, #tpu.memory_space<smem>>
    %2 = vector.broadcast %1 : f32 to vector<16x128xf32>
    %c0_2 = arith.constant 0 : index
    %3 = memref.load %arg1[%c0_2] : memref<9xf32, #tpu.memory_space<smem>>
    %4 = vector.broadcast %3 : f32 to vector<16x128xf32>
    %5 = arith.cmpf ogt, %0, %4 : vector<16x128xf32>
    %c1 = arith.constant 1 : index
    %6 = memref.load %arg2[%c1] : memref<10xf32, #tpu.memory_space<smem>>
    %7 = vector.broadcast %6 : f32 to vector<16x128xf32>
    %8 = arith.select %5, %7, %2 : vector<16x128xi1>, vector<16x128xf32>
    %c1_3 = arith.constant 1 : index
    %9 = memref.load %arg1[%c1_3] : memref<9xf32, #tpu.memory_space<smem>>
    %10 = vector.broadcast %9 : f32 to vector<16x128xf32>
    %11 = arith.cmpf ogt, %0, %10 : vector<16x128xf32>
    %c2 = arith.constant 2 : index
    %12 = memref.load %arg2[%c2] : memref<10xf32, #tpu.memory_space<smem>>
    %13 = vector.broadcast %12 : f32 to vector<16x128xf32>
    %14 = arith.select %11, %13, %8 : vector<16x128xi1>, vector<16x128xf32>
    %c2_4 = arith.constant 2 : index
    %15 = memref.load %arg1[%c2_4] : memref<9xf32, #tpu.memory_space<smem>>
    %16 = vector.broadcast %15 : f32 to vector<16x128xf32>
    %17 = arith.cmpf ogt, %0, %16 : vector<16x128xf32>
    %c3 = arith.constant 3 : index
    %18 = memref.load %arg2[%c3] : memref<10xf32, #tpu.memory_space<smem>>
    %19 = vector.broadcast %18 : f32 to vector<16x128xf32>
    %20 = arith.select %17, %19, %14 : vector<16x128xi1>, vector<16x128xf32>
    %c3_5 = arith.constant 3 : index
    %21 = memref.load %arg1[%c3_5] : memref<9xf32, #tpu.memory_space<smem>>
    %22 = vector.broadcast %21 : f32 to vector<16x128xf32>
    %23 = arith.cmpf ogt, %0, %22 : vector<16x128xf32>
    %c4 = arith.constant 4 : index
    %24 = memref.load %arg2[%c4] : memref<10xf32, #tpu.memory_space<smem>>
    %25 = vector.broadcast %24 : f32 to vector<16x128xf32>
    %26 = arith.select %23, %25, %20 : vector<16x128xi1>, vector<16x128xf32>
    %c4_6 = arith.constant 4 : index
    %27 = memref.load %arg1[%c4_6] : memref<9xf32, #tpu.memory_space<smem>>
    %28 = vector.broadcast %27 : f32 to vector<16x128xf32>
    %29 = arith.cmpf ogt, %0, %28 : vector<16x128xf32>
    %c5 = arith.constant 5 : index
    %30 = memref.load %arg2[%c5] : memref<10xf32, #tpu.memory_space<smem>>
    %31 = vector.broadcast %30 : f32 to vector<16x128xf32>
    %32 = arith.select %29, %31, %26 : vector<16x128xi1>, vector<16x128xf32>
    %c5_7 = arith.constant 5 : index
    %33 = memref.load %arg1[%c5_7] : memref<9xf32, #tpu.memory_space<smem>>
    %34 = vector.broadcast %33 : f32 to vector<16x128xf32>
    %35 = arith.cmpf ogt, %0, %34 : vector<16x128xf32>
    %c6 = arith.constant 6 : index
    %36 = memref.load %arg2[%c6] : memref<10xf32, #tpu.memory_space<smem>>
    %37 = vector.broadcast %36 : f32 to vector<16x128xf32>
    %38 = arith.select %35, %37, %32 : vector<16x128xi1>, vector<16x128xf32>
    %c6_8 = arith.constant 6 : index
    %39 = memref.load %arg1[%c6_8] : memref<9xf32, #tpu.memory_space<smem>>
    %40 = vector.broadcast %39 : f32 to vector<16x128xf32>
    %41 = arith.cmpf ogt, %0, %40 : vector<16x128xf32>
    %c7 = arith.constant 7 : index
    %42 = memref.load %arg2[%c7] : memref<10xf32, #tpu.memory_space<smem>>
    %43 = vector.broadcast %42 : f32 to vector<16x128xf32>
    %44 = arith.select %41, %43, %38 : vector<16x128xi1>, vector<16x128xf32>
    %c7_9 = arith.constant 7 : index
    %45 = memref.load %arg1[%c7_9] : memref<9xf32, #tpu.memory_space<smem>>
    %46 = vector.broadcast %45 : f32 to vector<16x128xf32>
    %47 = arith.cmpf ogt, %0, %46 : vector<16x128xf32>
    %c8 = arith.constant 8 : index
    %48 = memref.load %arg2[%c8] : memref<10xf32, #tpu.memory_space<smem>>
    %49 = vector.broadcast %48 : f32 to vector<16x128xf32>
    %50 = arith.select %47, %49, %44 : vector<16x128xi1>, vector<16x128xf32>
    %c8_10 = arith.constant 8 : index
    %51 = memref.load %arg1[%c8_10] : memref<9xf32, #tpu.memory_space<smem>>
    %52 = vector.broadcast %51 : f32 to vector<16x128xf32>
    %53 = arith.cmpf ogt, %0, %52 : vector<16x128xf32>
    %c9 = arith.constant 9 : index
    %54 = memref.load %arg2[%c9] : memref<10xf32, #tpu.memory_space<smem>>
    %55 = vector.broadcast %54 : f32 to vector<16x128xf32>
    %56 = arith.select %53, %55, %50 : vector<16x128xi1>, vector<16x128xf32>
    %c0_11 = arith.constant 0 : index
    %c0_12 = arith.constant 0 : index
    %57 = vector.load %arg4[%c0_11, %c0_12] : memref<16x128xf32, #tpu.memory_space<vmem>>, vector<16x128xf32>
    tpu.vector_store %arg4[%c0_11, %c0_12], %56 {strides = array<i32>} : memref<16x128xf32, #tpu.memory_space<vmem>>, vector<16x128xf32>,
    return
  }
  func.func @transform_0(%arg0: i32) -> i32 {
    %c0_i32 = arith.constant 0 : i32
    %c0_i32_0 = arith.constant 0 : i32
    return %c0_i32 : i32
  }
  func.func @transform_1(%arg0: i32) -> i32 {
    %c0_i32 = arith.constant 0 : i32
    %c0_i32_0 = arith.constant 0 : i32
    return %c0_i32 : i32
  }
  func.func @transform_2(%arg0: i32) -> (i32, i32) {
    %c0_i32 = arith.constant 0 : i32
    %c0_i32_0 = arith.constant 0 : i32
    return %arg0, %c0_i32 : i32, i32
  }
  func.func @transform_3(%arg0: i32) -> (i32, i32) {
    %c0_i32 = arith.constant 0 : i32
    %c0_i32_0 = arith.constant 0 : i32
    return %arg0, %c0_i32 : i32, i32
  }
}

</mosaic_0001>

<llo_original>
// kernel: tpu_custom_call.1
$region0: #{tpu_custom_call.1}
  #allocation0 [shape = 'u32[]', space=smem, size = 0x4, offset = 0x4, fixed_abs, tag = 'smem constant byte address 0x4 - core index']
  #allocation1 [shape = 'u32[144,128]{1,0:T(1,128)}', space=vmem, size = 0x12000, scoped, tag = 'internal scratch']
  %s0 = inlined_call_operand.hbm [shape: f32[9], index: 0, kind: input, shape index: {}]
  %s1 = inlined_call_operand.vmem [shape: f32[10], index: 1, kind: input, shape index: {}]
  %s2 = inlined_call_operand.hbm [shape: f32[16,128], index: 2, kind: input, shape index: {}]
  %s3 = inlined_call_operand.hbm [shape: f32[16,128], index: 3, kind: output, shape index: {}]
  %s4 = sld [smem:[#allocation0]]
  $region34: #{tpu_custom_call.1} parent=0
    _
  %s6 = ssub.s32 1, %s4
  %s7 = scalar_select 0, %s6, %s4
  $region1: #{tpu_custom_call.1} parent=0
    #allocation2 [shape = 'u8[512]{0}', space=smem, size = 0x200, scoped, tag = 'input window, operand 0, single buffered']
    #allocation3 [shape = 's32[1]{0}', space=sflag, size = 0x4, scoped, tag = 'scoped memory for tpu_custom_call.1']
    #allocation4 [shape = 's32[1]{0}', space=sflag, size = 0x4, scoped, tag = 'scoped memory for tpu_custom_call.1']
    #allocation5 [shape = 's32[1]{0}', space=sflag, size = 0x4, scoped, tag = 'scoped memory for tpu_custom_call.1']
    #allocation6 [shape = 's32[1]{0}', space=sflag, size = 0x4, scoped, tag = 'scoped memory for tpu_custom_call.1']
    #allocation7 [shape = 'u8[512]{0}', space=smem, size = 0x200, scoped, tag = 'input window, operand 1, single buffered']
    #allocation8 [shape = 'u8[8192]{0}', space=vmem, size = 0x2000, scoped, tag = 'input window, operand 2, single buffered']
    #allocation9 [shape = 'u8[8192]{0}', space=vmem, size = 0x2000, scoped, tag = 'output window, operand 0, single buffered']
    %8 = vsyncpa [#allocation5], 0
    %9 = vsyncpa [#allocation6], 0
    %10 = vsyncpa [#allocation3], 0
    %11 = vsyncpa [#allocation4], 0
    // Predicated region
    $region2: #{tpu_custom_call.1} parent=1 // pred_check
      _
    $region3: #{tpu_custom_call.1} parent=1 // pred_check_branch
      %13 = sbr.rel (0) target = $region5
    $region4: #{tpu_custom_call.1} parent=1 // pred_region
      %s15 = ssub.s32 16, 16
      %16 = vsyncadd [#allocation5], %s15
      %19 = dma.hbm_to_smem %s0, 16, [#allocation2], [#allocation5]
    $region5: #{tpu_custom_call.1} parent=1 // pred_fallthru
      _
    // Predicated region
    $region6: #{tpu_custom_call.1} parent=1 // pred_check
      _
    $region7: #{tpu_custom_call.1} parent=1 // pred_check_branch
      %21 = sbr.rel (0) target = $region9
    $region8: #{tpu_custom_call.1} parent=1 // pred_region
      %s23 = ssub.s32 16, 16
      %24 = vsyncadd [#allocation6], %s23
      %s26 = sshll.u32 %s1, 4
      %s27 = int_to_ptr.vmem [resolvable:$true] %s26
      %29 = dma.vmem_to_smem %s27, 16, [#allocation7], [#allocation6]
    $region9: #{tpu_custom_call.1} parent=1 // pred_fallthru
      _
    // Predicated region
    $region10: #{tpu_custom_call.1} parent=1 // pred_check
      _
    $region11: #{tpu_custom_call.1} parent=1 // pred_check_branch
      %31 = sbr.rel (0) target = $region13
    $region12: #{tpu_custom_call.1} parent=1 // pred_region
      %s33 = ssub.s32 256, 256
      %34 = vsyncadd [#allocation3], %s33
      %s35 = sshll.u32 [#allocation8], 4
      %s36 = int_to_ptr.vmem [resolvable:$true] %s35
      %41 = dma.hbm_to_vmem [thread:$0]  %s2, 256, %s36, [#allocation3], 128, 128, 8
    $region13: #{tpu_custom_call.1} parent=1 // pred_fallthru
      _
    // Predicated region
    $region14: #{tpu_custom_call.1} parent=1 // pred_check
      _
    $region15: #{tpu_custom_call.1} parent=1 // pred_check_branch
      %43 = sbr.rel (0) target = $region17
    $region16: #{tpu_custom_call.1} parent=1 // pred_region
      %44 = dma.done [#allocation5], 16
    $region17: #{tpu_custom_call.1} parent=1 // pred_fallthru
      _
    // Predicated region
    $region18: #{tpu_custom_call.1} parent=1 // pred_check
      _
    $region19: #{tpu_custom_call.1} parent=1 // pred_check_branch
      %46 = sbr.rel (0) target = $region21
    $region20: #{tpu_custom_call.1} parent=1 // pred_region
      %47 = dma.done [#allocation6], 16
    $region21: #{tpu_custom_call.1} parent=1 // pred_fallthru
      _
    // Predicated region
    $region22: #{tpu_custom_call.1} parent=1 // pred_check
      _
    $region23: #{tpu_custom_call.1} parent=1 // pred_check_branch
      %49 = sbr.rel (0) target = $region25
    $region24: #{tpu_custom_call.1} parent=1 // pred_region
      %50 = dma.done [#allocation3], 256
    $region25: #{tpu_custom_call.1} parent=1 // pred_fallthru
      _
    %51 = sfence
    %v52 = vld [vmem:[#allocation8] sm:$0xff]
    %v53 = vld [vmem:[#allocation8 + $0x8] sm:$0xff]
    %s54 = sld [smem:[#allocation7]]
    %v55 = vstv %s54
    %s56 = sld [smem:[#allocation2]]
    %v57 = vstv %s56
    %vm58 = vcmp.gt.f32.partialorder %v52, %v57
    %vm59 = vcmp.gt.f32.partialorder %v53, %v57
    %s60 = sld [smem:[#allocation7 + $0x1]]
    %v61 = vstv %s60
    %v62 = vsel %vm58, %v61, %v55
    %v63 = vsel %vm59, %v61, %v55
    %s64 = sld [smem:[#allocation2 + $0x1]]
    %v65 = vstv %s64
    %vm66 = vcmp.gt.f32.partialorder %v52, %v65
    %vm67 = vcmp.gt.f32.partialorder %v53, %v65
    %s68 = sld [smem:[#allocation7 + $0x2]]
    %v69 = vstv %s68
    %v70 = vsel %vm66, %v69, %v62
    %v71 = vsel %vm67, %v69, %v63
    %s72 = sld [smem:[#allocation2 + $0x2]]
    %v73 = vstv %s72
    %vm74 = vcmp.gt.f32.partialorder %v52, %v73
    %vm75 = vcmp.gt.f32.partialorder %v53, %v73
    %s76 = sld [smem:[#allocation7 + $0x3]]
    %v77 = vstv %s76
    %v78 = vsel %vm74, %v77, %v70
    %v79 = vsel %vm75, %v77, %v71
    %s80 = sld [smem:[#allocation2 + $0x3]]
    %v81 = vstv %s80
    %vm82 = vcmp.gt.f32.partialorder %v52, %v81
    %vm83 = vcmp.gt.f32.partialorder %v53, %v81
    %s84 = sld [smem:[#allocation7 + $0x4]]
    %v85 = vstv %s84
    %v86 = vsel %vm82, %v85, %v78
    %v87 = vsel %vm83, %v85, %v79
    %s88 = sld [smem:[#allocation2 + $0x4]]
    %v89 = vstv %s88
    %vm90 = vcmp.gt.f32.partialorder %v52, %v89
    %vm91 = vcmp.gt.f32.partialorder %v53, %v89
    %s92 = sld [smem:[#allocation7 + $0x5]]
    %v93 = vstv %s92
    %v94 = vsel %vm90, %v93, %v86
    %v95 = vsel %vm91, %v93, %v87
    %s96 = sld [smem:[#allocation2 + $0x5]]
    %v97 = vstv %s96
    %vm98 = vcmp.gt.f32.partialorder %v52, %v97
    %vm99 = vcmp.gt.f32.partialorder %v53, %v97
    %s100 = sld [smem:[#allocation7 + $0x6]]
    %v101 = vstv %s100
    %v102 = vsel %vm98, %v101, %v94
    %v103 = vsel %vm99, %v101, %v95
    %s104 = sld [smem:[#allocation2 + $0x6]]
    %v105 = vstv %s104
    %vm106 = vcmp.gt.f32.partialorder %v52, %v105
    %vm107 = vcmp.gt.f32.partialorder %v53, %v105
    %s108 = sld [smem:[#allocation7 + $0x7]]
    %v109 = vstv %s108
    %v110 = vsel %vm106, %v109, %v102
    %v111 = vsel %vm107, %v109, %v103
    %s112 = sld [smem:[#allocation2 + $0x7]]
    %v113 = vstv %s112
    %vm114 = vcmp.gt.f32.partialorder %v52, %v113
    %vm115 = vcmp.gt.f32.partialorder %v53, %v113
    %s116 = sld [smem:[#allocation7 + $0x8]]
    %v117 = vstv %s116
    %v118 = vsel %vm114, %v117, %v110
    %v119 = vsel %vm115, %v117, %v111
    %s120 = sld [smem:[#allocation2 + $0x8]]
    %v121 = vstv %s120
    %vm122 = vcmp.gt.f32.partialorder %v52, %v121
    %vm123 = vcmp.gt.f32.partialorder %v53, %v121
    %s124 = sld [smem:[#allocation7 + $0x9]]
    %v125 = vstv %s124
    %v126 = vsel %vm122, %v125, %v118
    %v127 = vsel %vm123, %v125, %v119
    %128 = vst [vmem:[#allocation9] sm:$0xff] %v126
    %129 = vst [vmem:[#allocation9 + $0x8] sm:$0xff] %v127
    // Predicated region
    $region26: #{tpu_custom_call.1} parent=1 // pred_check
      _
    $region27: #{tpu_custom_call.1} parent=1 // pred_check_branch
      %131 = sbr.rel (0) target = $region29
    $region28: #{tpu_custom_call.1} parent=1 // pred_region
      %s133 = ssub.s32 256, 256
      %134 = vsyncadd [#allocation4], %s133
      %s135 = sshll.u32 [#allocation9], 4
      %s136 = int_to_ptr.vmem [resolvable:$true] %s135
      %141 = dma.vmem_to_hbm [thread:$0]  %s136, 256, %s3, [#allocation4], 128, 128, 8
    $region29: #{tpu_custom_call.1} parent=1 // pred_fallthru
      _
    // Predicated region
    $region30: #{tpu_custom_call.1} parent=1 // pred_check
      _
    $region31: #{tpu_custom_call.1} parent=1 // pred_check_branch
      %143 = sbr.rel (0) target = $region33
    $region32: #{tpu_custom_call.1} parent=1 // pred_region
      %144 = dma.done [#allocation4], 256
    $region33: #{tpu_custom_call.1} parent=1 // pred_fallthru
      _
    %145 = vsyncpa [#allocation3], 1
    %146 = vsyncpa [#allocation4], 1
    %147 = vsyncpa [#allocation5], 1
    %148 = vsyncpa [#allocation6], 1

</llo_original>
